<compile_context>
chip_gen: v7x
topology: tpu7x:2x2x1
jax: 0.10.0
libtpu: 0.0.40
codegen_flags: <defaults>
</compile_context>

<pallas_src>
import jax
import jax.numpy as jnp
from jax.experimental import pallas as pl
from jax.experimental.pallas import tpu as pltpu


def _asp_kernel(q_ref, u_ref, keep_ref, w1_ref, p1_ref, w2_ref, p2_ref, out_ref):
    TB, T, E = u_ref.shape
    H1 = w1_ref.shape[1]
    H2 = w2_ref.shape[1]
    M = TB * T

    q = q_ref[...]                       # (TB, E)    bf16
    u = u_ref[...]                       # (TB, T, E) bf16
    keep = keep_ref[...]                 # (TB, T)    f32: 1.0 = keep, 0.0 = masked

    b1 = p1_ref[0:1, :]                  # (1, H1) fc1-l1 bias
    a1 = p1_ref[1:2, :]                  # (1, H1) Dice alpha 1
    b2 = p2_ref[0:1, :]                  # (1, H2) fc1-l2 bias
    a2 = p2_ref[1:2, :]                  # (1, H2) Dice alpha 2
    w3r = p2_ref[2:3, :]                 # (1, H2) fc2 weight row
    b3 = p2_ref[3:4, 0:1]                # (1, 1)  fc2 bias

    # fc1 layer 1: concat([q, u, q-u, q*u]) @ W1 folded host-side into one K=3E matmul
    # on x1 = [u, q*u, q_broadcast]  (single MXU pass instead of 3-4 K=E passes).
    uf = u.reshape(M, E)
    qf = jnp.broadcast_to(q[:, None, :], (TB, T, E)).reshape(M, E)
    x1 = jnp.concatenate([uf, qf * uf, qf], axis=-1)                        # (M, 3E) bf16
    h = jnp.dot(x1, w1_ref[...], preferred_element_type=jnp.float32) + b1   # (M, H1) f32

    # Dice activation with eval-mode identity BatchNorm: p = sigmoid(h);
    # out = p*h + (1-p)*alpha*h.
    # TODO(synk): training-mode BatchNorm batch statistics inside Dice are not reproduced.
    p = jax.nn.sigmoid(h)
    h = h * (p + (1.0 - p) * a1)

    # fc1 layer 2 (H1 -> H2) + Dice.
    h = jnp.dot(h.astype(w2_ref.dtype), w2_ref[...],
                preferred_element_type=jnp.float32) + b2                    # (M, H2) f32
    p = jax.nn.sigmoid(h)
    h = h * (p + (1.0 - p) * a2)

    # fc2 (H2 -> 1): lane-broadcast multiply + lane reduction (XLU), no N=1 MXU pass.
    score = jnp.sum(h.reshape(TB, T, H2) * w3r, axis=-1) + b3               # (TB, T) f32
    score = jnp.where(keep > 0.5, score, 0.0)                               # masked_fill(mask, 0)

    # Pooling: weighted sum over T on the VPU; emit lane-dense transposed (E, TB).
    pooled = jnp.sum(score[:, :, None] * u.astype(jnp.float32), axis=1)     # (TB, E)
    out_ref[...] = pooled.T.astype(out_ref.dtype)                           # (E, TB)


def attention_sequence_pooling(query_ad, user_behavior, params, mask=None, *, block_b=256):
    """Pallas forward of AttentionSequencePoolingLayer. Returns (B, 1, E)."""
    B, T, E = user_behavior.shape
    assert query_ad.shape == (B, 1, E)

    w1, b1, a1, w2, b2, a2, w3, b3 = params
    H1, H2 = w1.shape[1], w2.shape[1]

    # Host-side (free) weight folding of the 4-way concat input:
    #   [q, u, q-u, q*u] @ W1 == u @ (W1u - W1d) + (q*u) @ W1p + q @ (W1q + W1d)
    # packed as one (3E, H1) matrix acting on x1 = [u, q*u, q_broadcast].
    wu = w1[E:2 * E] - w1[2 * E:3 * E]
    wp = w1[3 * E:4 * E]
    wq = w1[0:E] + w1[2 * E:3 * E]
    w1f = jnp.concatenate([wu, wp, wq], axis=0).astype(jnp.bfloat16)        # (3E, H1)
    w2b = jnp.asarray(w2, jnp.bfloat16)                                     # (H1, H2)
    p1 = jnp.stack([b1, a1], axis=0).astype(jnp.float32)                    # (2, H1)
    b3_val = jnp.asarray(b3, jnp.float32).reshape(())
    p2 = jnp.stack([b2, a2, w3[:, 0], jnp.full((H2,), b3_val)],
                   axis=0).astype(jnp.float32)                              # (4, H2)

    # Batch tiling:
    #  * B <= block_b: single grid step, blocks == full arrays, no padding needed.
    #  * otherwise TB is a multiple of 128 (lane-dense (E, TB) output blocks) and is
    #    capped so large batches keep >= ~8 grid steps (v7x megacore + pipelining).
    if B <= block_b:
        TB = B
        Bp = B
    else:
        TB = max(128, (min(block_b, B) // 128) * 128)
        while TB > 128 and pl.cdiv(B, TB) < 8:
            TB -= 128
        Bp = pl.cdiv(B, TB) * TB
    pad = Bp - B

    q2 = query_ad.reshape(B, E).astype(jnp.bfloat16)
    u3 = user_behavior.astype(jnp.bfloat16)
    if mask is None:
        keep = jnp.ones((B, T), jnp.float32)
    else:
        keep = 1.0 - mask.astype(jnp.float32).reshape(B, T)
    if pad:
        q2 = jnp.pad(q2, ((0, pad), (0, 0)))
        u3 = jnp.pad(u3, ((0, pad), (0, 0), (0, 0)))
        keep = jnp.pad(keep, ((0, pad), (0, 0)))   # padded rows fully masked -> output 0

    def full_spec(a):
        nd = a.ndim
        return pl.BlockSpec(a.shape, lambda *_, _nd=nd: (0,) * _nd)

    grid_spec = pltpu.PrefetchScalarGridSpec(
        num_scalar_prefetch=0,
        grid=(Bp // TB,),
        in_specs=[
            pl.BlockSpec((TB, E), lambda i: (i, 0)),          # query_ad (batch-tiled)
            pl.BlockSpec((TB, T, E), lambda i: (i, 0, 0)),    # user_behavior (batch-tiled)
            pl.BlockSpec((TB, T), lambda i: (i, 0)),          # keep = 1 - mask
            full_spec(w1f), full_spec(p1), full_spec(w2b), full_spec(p2),
        ],
        # Lane-dense transposed output: (E, TB) blocks of an (E, Bp) slab.
        out_specs=pl.BlockSpec((E, TB), lambda i: (0, i)),
    )

    out_t = pl.pallas_call(
        _asp_kernel,
        out_shape=jax.ShapeDtypeStruct((E, Bp), jnp.float32),
        grid_spec=grid_spec,
        compiler_params=pltpu.CompilerParams(dimension_semantics=("parallel",)),
    )(q2, u3, keep, w1f, p1, w2b, p2)

    return out_t[:, :B].T.reshape(B, 1, E)


def reference(query_ad, user_behavior, params, mask=None):
    """Pure-JAX f32 reference mirroring the PyTorch forward."""
    w1, b1, a1, w2, b2, a2, w3, b3 = params
    B, T, E = user_behavior.shape
    queries = jnp.broadcast_to(query_ad, (B, T, E))
    att_in = jnp.concatenate(
        [queries, user_behavior, queries - user_behavior, queries * user_behavior],
        axis=-1)
    h = att_in @ w1 + b1
    p = jax.nn.sigmoid(h)
    h = p * h + (1.0 - p) * a1 * h
    h = h @ w2 + b2
    p = jax.nn.sigmoid(h)
    h = p * h + (1.0 - p) * a2 * h
    score = h @ w3 + b3                     # (B, T, 1)
    score = jnp.swapaxes(score, 1, 2)       # (B, 1, T)
    if mask is not None:
        score = jnp.where(mask[:, None, :], 0.0, score)
    return jnp.matmul(score, user_behavior)  # (B, 1, E)


if __name__ == "__main__":
    key = jax.random.PRNGKey(0)
    T, E = 8, 4                  # embedding_dim=4 (module default)
    H1, H2 = 64, 16              # hidden_unit=[64, 16]
    ks = jax.random.split(key, 8)

    # Deterministic synthetic parameters (shapes from the module __init__).
    w1 = jax.random.normal(ks[2], (4 * E, H1), jnp.float32) * 0.1
    b1 = jax.random.normal(ks[3], (H1,), jnp.float32) * 0.01
    a1 = jnp.zeros((H1,), jnp.float32)       # Dice alpha init (torch.zeros)
    w2 = jax.random.normal(ks[4], (H1, H2), jnp.float32) * 0.1
    b2 = jax.random.normal(ks[5], (H2,), jnp.float32) * 0.01
    a2 = jnp.zeros((H2,), jnp.float32)
    w3 = jax.random.normal(ks[6], (H2, 1), jnp.float32) * 0.1
    b3 = jax.random.normal(ks[7], (1,), jnp.float32) * 0.01
    params = (w1, b1, a1, w2, b2, a2, w3, b3)

    # Small case (module-default shapes): single grid step, no padding.
    B = 2
    query_ad = jax.random.normal(ks[0], (B, 1, E), jnp.float32)
    user_behavior = jax.random.normal(ks[1], (B, T, E), jnp.float32)
    mask = jnp.zeros((B, T), dtype=bool).at[:, T - 2:].set(True)

    out = attention_sequence_pooling(query_ad, user_behavior, params, mask=mask)
    out = jax.block_until_ready(out)
    ref = reference(query_ad, user_behavior, params, mask=mask)
    assert out.shape == (B, 1, E)
    assert jnp.allclose(out, ref, atol=5e-2, rtol=5e-2), (out, ref)

    # Larger batch: exercises the tiled (grid > 1), padded, lane-dense-output path.
    B2 = 300
    kq, ku = jax.random.split(jax.random.PRNGKey(1))
    query_ad2 = jax.random.normal(kq, (B2, 1, E), jnp.float32)
    user_behavior2 = jax.random.normal(ku, (B2, T, E), jnp.float32)
    mask2 = jnp.zeros((B2, T), dtype=bool).at[:, T - 3:].set(True)

    out2 = attention_sequence_pooling(query_ad2, user_behavior2, params,
                                      mask=mask2, block_b=256)
    out2 = jax.block_until_ready(out2)
    ref2 = reference(query_ad2, user_behavior2, params, mask=mask2)
    assert out2.shape == (B2, 1, E)
    assert jnp.allclose(out2, ref2, atol=5e-2, rtol=5e-2), \
        float(jnp.max(jnp.abs(out2 - ref2)))

    print("KERNEL_OK")
</pallas_src>

<mosaic_0001>
module attributes {stable_mosaic.version = 11 : i64} {
  func.func @_asp_kernel(%arg0: i32, %arg1: memref<2x4xbf16, #tpu.memory_space<vmem>>, %arg2: memref<2x8x4xbf16, #tpu.memory_space<vmem>>, %arg3: memref<2x8xf32, #tpu.memory_space<vmem>>, %arg4: memref<12x64xbf16, #tpu.memory_space<vmem>>, %arg5: memref<2x64xf32, #tpu.memory_space<vmem>>, %arg6: memref<64x16xbf16, #tpu.memory_space<vmem>>, %arg7: memref<4x16xf32, #tpu.memory_space<vmem>>, %arg8: memref<4x2xf32, #tpu.memory_space<vmem>>) attributes {dimension_semantics = [#tpu.dimension_semantics<parallel>], iteration_bounds = array<i64: 1>, scalar_prefetch = 0 : i64, scratch_operands = 0 : i64, tpu.core_type = #tpu.core_type<tc>, window_params = [{transform_indices = @transform_0, window_bounds = array<i64: 2, 4>}, {transform_indices = @transform_1, window_bounds = array<i64: 2, 8, 4>}, {transform_indices = @transform_2, window_bounds = array<i64: 2, 8>}, {pipeline_mode = #tpu.pipeline_mode<synchronous>, transform_indices = @transform_3, window_bounds = array<i64: 12, 64>}, {pipeline_mode = #tpu.pipeline_mode<synchronous>, transform_indices = @transform_4, window_bounds = array<i64: 2, 64>}, {pipeline_mode = #tpu.pipeline_mode<synchronous>, transform_indices = @transform_5, window_bounds = array<i64: 64, 16>}, {pipeline_mode = #tpu.pipeline_mode<synchronous>, transform_indices = @transform_6, window_bounds = array<i64: 4, 16>}, {transform_indices = @transform_7, window_bounds = array<i64: 4, 2>}]} {
    %c0 = arith.constant 0 : index
    %c0_0 = arith.constant 0 : index
    %0 = vector.load %arg1[%c0, %c0_0] : memref<2x4xbf16, #tpu.memory_space<vmem>>, vector<2x4xbf16>
    %c0_1 = arith.constant 0 : index
    %c0_2 = arith.constant 0 : index
    %c0_3 = arith.constant 0 : index
    %1 = vector.load %arg2[%c0_1, %c0_2, %c0_3] : memref<2x8x4xbf16, #tpu.memory_space<vmem>>, vector<2x8x4xbf16>
    %c0_4 = arith.constant 0 : index
    %c0_5 = arith.constant 0 : index
    %2 = vector.load %arg3[%c0_4, %c0_5] : memref<2x8xf32, #tpu.memory_space<vmem>>, vector<2x8xf32>
    %c0_6 = arith.constant 0 : index
    %c0_7 = arith.constant 0 : index
    %3 = vector.load %arg5[%c0_6, %c0_7] : memref<2x64xf32, #tpu.memory_space<vmem>>, vector<1x64xf32>
    %c1 = arith.constant 1 : index
    %c0_8 = arith.constant 0 : index
    %4 = vector.load %arg5[%c1, %c0_8] : memref<2x64xf32, #tpu.memory_space<vmem>>, vector<1x64xf32>
    %c0_9 = arith.constant 0 : index
    %c0_10 = arith.constant 0 : index
    %5 = vector.load %arg7[%c0_9, %c0_10] : memref<4x16xf32, #tpu.memory_space<vmem>>, vector<1x16xf32>
    %c1_11 = arith.constant 1 : index
    %c0_12 = arith.constant 0 : index
    %6 = vector.load %arg7[%c1_11, %c0_12] : memref<4x16xf32, #tpu.memory_space<vmem>>, vector<1x16xf32>
    %c2 = arith.constant 2 : index
    %c0_13 = arith.constant 0 : index
    %7 = vector.load %arg7[%c2, %c0_13] : memref<4x16xf32, #tpu.memory_space<vmem>>, vector<1x16xf32>
    %c3 = arith.constant 3 : index
    %c0_14 = arith.constant 0 : index
    %8 = vector.load %arg7[%c3, %c0_14] : memref<4x16xf32, #tpu.memory_space<vmem>>, vector<1x1xf32>
    %9 = vector.shape_cast %1 : vector<2x8x4xbf16> to vector<16x4xbf16>
    %10 = vector.shape_cast %0 : vector<2x4xbf16> to vector<2x1x4xbf16>
    %11 = vector.shape_cast %10 : vector<2x1x4xbf16> to vector<2x1x4xbf16>
    %12 = vector.broadcast %11 : vector<2x1x4xbf16> to vector<2x8x4xbf16>
    %13 = vector.shape_cast %12 : vector<2x8x4xbf16> to vector<16x4xbf16>
    %14 = arith.mulf %13, %9 : vector<16x4xbf16>
    %15 = tpu.concatenate %9, %14, %13 in 1 : vector<16x4xbf16>, vector<16x4xbf16>, vector<16x4xbf16> -> vector<16x12xbf16>
    %c0_15 = arith.constant 0 : index
    %c0_16 = arith.constant 0 : index
    %16 = vector.load %arg4[%c0_15, %c0_16] : memref<12x64xbf16, #tpu.memory_space<vmem>>, vector<12x64xbf16>
    %cst = arith.constant dense<0.000000e+00> : vector<16x64xf32>
    %17 = tpu.matmul %15, %16, %cst {dimension_numbers = #tpu.dot_dimension_numbers<[1], [0], [0], [1], [0, 0, 1, 1], [], []>} : vector<16x12xbf16>, vector<12x64xbf16>, vector<16x64xf32> -> vector<16x64xf32>
    %18 = vector.broadcast %3 : vector<1x64xf32> to vector<16x64xf32>
    %19 = arith.addf %17, %18 : vector<16x64xf32>
    %20 = arith.negf %19 : vector<16x64xf32>
    %21 = math.exp %20 : vector<16x64xf32>
    %cst_17 = arith.constant 1.000000e+00 : f32
    %22 = vector.broadcast %cst_17 : f32 to vector<16x64xf32>
    %23 = arith.addf %22, %21 : vector<16x64xf32>
    %24 = arith.divf %22, %23 : vector<16x64xf32>
    %cst_18 = arith.constant 1.000000e+00 : f32
    %25 = vector.broadcast %cst_18 : f32 to vector<16x64xf32>
    %26 = arith.subf %25, %24 : vector<16x64xf32>
    %27 = vector.broadcast %4 : vector<1x64xf32> to vector<16x64xf32>
    %28 = arith.mulf %26, %27 : vector<16x64xf32>
    %29 = arith.addf %24, %28 : vector<16x64xf32>
    %30 = arith.mulf %19, %29 : vector<16x64xf32>
    %31 = arith.truncf %30 : vector<16x64xf32> to vector<16x64xbf16>
    %c0_19 = arith.constant 0 : index
    %c0_20 = arith.constant 0 : index
    %32 = vector.load %arg6[%c0_19, %c0_20] : memref<64x16xbf16, #tpu.memory_space<vmem>>, vector<64x16xbf16>
    %cst_21 = arith.constant dense<0.000000e+00> : vector<16x16xf32>
    %33 = tpu.matmul %31, %32, %cst_21 {dimension_numbers = #tpu.dot_dimension_numbers<[1], [0], [0], [1], [0, 0, 1, 1], [], []>} : vector<16x64xbf16>, vector<64x16xbf16>, vector<16x16xf32> -> vector<16x16xf32>
    %34 = vector.broadcast %5 : vector<1x16xf32> to vector<16x16xf32>
    %35 = arith.addf %33, %34 : vector<16x16xf32>
    %36 = arith.negf %35 : vector<16x16xf32>
    %37 = math.exp %36 : vector<16x16xf32>
    %cst_22 = arith.constant 1.000000e+00 : f32
    %38 = vector.broadcast %cst_22 : f32 to vector<16x16xf32>
    %39 = arith.addf %38, %37 : vector<16x16xf32>
    %40 = arith.divf %38, %39 : vector<16x16xf32>
    %cst_23 = arith.constant 1.000000e+00 : f32
    %41 = vector.broadcast %cst_23 : f32 to vector<16x16xf32>
    %42 = arith.subf %41, %40 : vector<16x16xf32>
    %43 = vector.broadcast %6 : vector<1x16xf32> to vector<16x16xf32>
    %44 = arith.mulf %42, %43 : vector<16x16xf32>
    %45 = arith.addf %40, %44 : vector<16x16xf32>
    %46 = arith.mulf %35, %45 : vector<16x16xf32>
    %47 = vector.shape_cast %46 : vector<16x16xf32> to vector<2x8x16xf32>
    %48 = vector.shape_cast %7 : vector<1x16xf32> to vector<1x1x16xf32>
    %49 = vector.broadcast %48 : vector<1x1x16xf32> to vector<2x8x16xf32>
    %50 = arith.mulf %47, %49 : vector<2x8x16xf32>
    %cst_24 = arith.constant dense<0.000000e+00> : vector<2x8xf32>
    %51 = vector.multi_reduction <add>, %50, %cst_24 [2] : vector<2x8x16xf32> to vector<2x8xf32>
    %52 = vector.broadcast %8 : vector<1x1xf32> to vector<2x8xf32>
    %53 = arith.addf %51, %52 : vector<2x8xf32>
    %cst_25 = arith.constant 5.000000e-01 : f32
    %54 = vector.broadcast %cst_25 : f32 to vector<2x8xf32>
    %55 = arith.cmpf ogt, %2, %54 : vector<2x8xf32>
    %cst_26 = arith.constant 0.000000e+00 : f32
    %56 = vector.broadcast %cst_26 : f32 to vector<2x8xf32>
    %57 = arith.select %55, %53, %56 : vector<2x8xi1>, vector<2x8xf32>
    %58 = vector.shape_cast %57 : vector<2x8xf32> to vector<2x8x1xf32>
    %59 = arith.extf %1 : vector<2x8x4xbf16> to vector<2x8x4xf32>
    %60 = vector.broadcast %58 : vector<2x8x1xf32> to vector<2x8x4xf32>
    %61 = arith.mulf %60, %59 : vector<2x8x4xf32>
    %cst_27 = arith.constant dense<0.000000e+00> : vector<2x4xf32>
    %62 = vector.multi_reduction <add>, %61, %cst_27 [1] : vector<2x8x4xf32> to vector<2x4xf32>
    %63 = tpu.transpose %62, [1, 0] : vector<2x4xf32> -> vector<4x2xf32>
    %c0_28 = arith.constant 0 : index
    %c0_29 = arith.constant 0 : index
    %64 = vector.load %arg8[%c0_28, %c0_29] : memref<4x2xf32, #tpu.memory_space<vmem>>, vector<4x2xf32>
    tpu.vector_store %arg8[%c0_28, %c0_29], %63 {strides = array<i32>} : memref<4x2xf32, #tpu.memory_space<vmem>>, vector<4x2xf32>,
    return
  }
  func.func @transform_0(%arg0: i32) -> (i32, i32) {
    %c0_i32 = arith.constant 0 : i32
    %c0_i32_0 = arith.constant 0 : i32
    return %arg0, %c0_i32 : i32, i32
  }
  func.func @transform_1(%arg0: i32) -> (i32, i32, i32) {
    %c0_i32 = arith.constant 0 : i32
    %c0_i32_0 = arith.constant 0 : i32
    %c0_i32_1 = arith.constant 0 : i32
    return %arg0, %c0_i32, %c0_i32_0 : i32, i32, i32
  }
  func.func @transform_2(%arg0: i32) -> (i32, i32) {
    %c0_i32 = arith.constant 0 : i32
    %c0_i32_0 = arith.constant 0 : i32
    return %arg0, %c0_i32 : i32, i32
  }
  func.func @transform_3(%arg0: i32) -> (i32, i32) {
    %c0_i32 = arith.constant 0 : i32
    %c0_i32_0 = arith.constant 0 : i32
    %c0_i32_1 = arith.constant 0 : i32
    return %c0_i32, %c0_i32_0 : i32, i32
  }
  func.func @transform_4(%arg0: i32) -> (i32, i32) {
    %c0_i32 = arith.constant 0 : i32
    %c0_i32_0 = arith.constant 0 : i32
    %c0_i32_1 = arith.constant 0 : i32
    return %c0_i32, %c0_i32_0 : i32, i32
  }
  func.func @transform_5(%arg0: i32) -> (i32, i32) {
    %c0_i32 = arith.constant 0 : i32
    %c0_i32_0 = arith.constant 0 : i32
    %c0_i32_1 = arith.constant 0 : i32
    return %c0_i32, %c0_i32_0 : i32, i32
  }
  func.func @transform_6(%arg0: i32) -> (i32, i32) {
    %c0_i32 = arith.constant 0 : i32
    %c0_i32_0 = arith.constant 0 : i32
    %c0_i32_1 = arith.constant 0 : i32
    return %c0_i32, %c0_i32_0 : i32, i32
  }
  func.func @transform_7(%arg0: i32) -> (i32, i32) {
    %c0_i32 = arith.constant 0 : i32
    %c0_i32_0 = arith.constant 0 : i32
    return %c0_i32, %arg0 : i32, i32
  }
}

</mosaic_0001>

<llo_original>
// kernel: tpu_custom_call.1
$region0: #{tpu_custom_call.1}
  #allocation0 [shape = 'u32[]', space=smem, size = 0x4, offset = 0x4, fixed_abs, tag = 'smem constant byte address 0x4 - core index']
  #allocation1 [shape = 'u32[144,128]{1,0:T(1,128)}', space=vmem, size = 0x12000, scoped, tag = 'internal scratch']
  %s0 = inlined_call_operand.vmem [shape: bf16[2,4], index: 0, kind: input, shape index: {}]
  %s1 = inlined_call_operand.vmem [shape: bf16[2,8,4], index: 1, kind: input, shape index: {}]
  %s2 = inlined_call_operand.vmem [shape: f32[2,8], index: 2, kind: input, shape index: {}]
  %s3 = inlined_call_operand.vmem [shape: bf16[12,64], index: 3, kind: input, shape index: {}]
  %s4 = inlined_call_operand.vmem [shape: f32[2,64], index: 4, kind: input, shape index: {}]
  %s5 = inlined_call_operand.vmem [shape: bf16[64,16], index: 5, kind: input, shape index: {}]
  %s6 = inlined_call_operand.vmem [shape: f32[4,16], index: 6, kind: input, shape index: {}]
  %s7 = inlined_call_operand.vmem [shape: f32[4,2], index: 7, kind: output, shape index: {}]
  %s8 = sld [smem:[#allocation0]]
  $region38: #{tpu_custom_call.1} parent=0
    _
  %s10 = ssub.s32 1, %s8
  %s11 = scalar_select 0, %s10, %s8
  // Predicated region
  $region2: #{tpu_custom_call.1} parent=0 // pred_check
    _
  $region3: #{tpu_custom_call.1} parent=0 // pred_check_branch
    %13 = sbr.rel (0) target = $region5
  $region4: #{tpu_custom_call.1} parent=0 // pred_region
    _
  $region5: #{tpu_custom_call.1} parent=0 // pred_fallthru
    _
  // Predicated region
  $region6: #{tpu_custom_call.1} parent=0 // pred_check
    _
  $region7: #{tpu_custom_call.1} parent=0 // pred_check_branch
    %15 = sbr.rel (0) target = $region9
  $region8: #{tpu_custom_call.1} parent=0 // pred_region
    _
  $region9: #{tpu_custom_call.1} parent=0 // pred_fallthru
    _
  // Predicated region
  $region10: #{tpu_custom_call.1} parent=0 // pred_check
    _
  $region11: #{tpu_custom_call.1} parent=0 // pred_check_branch
    %17 = sbr.rel (0) target = $region13
  $region12: #{tpu_custom_call.1} parent=0 // pred_region
    _
  $region13: #{tpu_custom_call.1} parent=0 // pred_fallthru
    _
  // Predicated region
  $region14: #{tpu_custom_call.1} parent=0 // pred_check
    _
  $region15: #{tpu_custom_call.1} parent=0 // pred_check_branch
    %19 = sbr.rel (0) target = $region17
  $region16: #{tpu_custom_call.1} parent=0 // pred_region
    _
  $region17: #{tpu_custom_call.1} parent=0 // pred_fallthru
    _
  // Predicated region
  $region18: #{tpu_custom_call.1} parent=0 // pred_check
    _
  $region19: #{tpu_custom_call.1} parent=0 // pred_check_branch
    %21 = sbr.rel (0) target = $region21
  $region20: #{tpu_custom_call.1} parent=0 // pred_region
    _
  $region21: #{tpu_custom_call.1} parent=0 // pred_fallthru
    _
  // Predicated region
  $region22: #{tpu_custom_call.1} parent=0 // pred_check
    _
  $region23: #{tpu_custom_call.1} parent=0 // pred_check_branch
    %23 = sbr.rel (0) target = $region25
  $region24: #{tpu_custom_call.1} parent=0 // pred_region
    _
  $region25: #{tpu_custom_call.1} parent=0 // pred_fallthru
    _
  // Predicated region
  $region26: #{tpu_custom_call.1} parent=0 // pred_check
    _
  $region27: #{tpu_custom_call.1} parent=0 // pred_check_branch
    %25 = sbr.rel (0) target = $region29
  $region28: #{tpu_custom_call.1} parent=0 // pred_region
    _
  $region29: #{tpu_custom_call.1} parent=0 // pred_fallthru
    _
  %v27 = vld [vmem:[%s0] sm:$0x1]
  %v28 = vld [vmem:[%s1] sm:$0xf]
  %v29 = vld [vmem:[%s1 + $0x4] sm:$0xf]
  %v30 = vld [vmem:[%s2] sm:$0x3]
  %v31 = vld [vmem:[%s4] sm:$0x1]
  %v32 = vld [vmem:[%s4 + $0x1] sm:$0x1]
  %v33 = vld [vmem:[%s6] sm:$0x1]
  %v34 = vld [vmem:[%s6 + $0x1] sm:$0x1]
  %v35 = vld [vmem:[%s6 + $0x2] sm:$0x1]
  %v36 = vld [vmem:[%s6 + $0x3] sm:$0x1]
  %v38 = vunpack.i.l.s16 %v27
  %v39 = vunpack.i.h.s16 %v27
  %v40 = vpack.i.b16 %v38, %v38
  %v41 = vpack.i.b16 %v39, %v39
  %v42 = vlaneseq
  %v43 = vshrl.u32 %v42, 7
  %v44 = vsub.s32 0, %v43
  %v45 = vrot.slane %v40, %v44
  %v46 = vlaneseq
  %v47 = vshrl.u32 %v46, 7
  %v48 = vsub.s32 0, %v47
  %v49 = vrot.slane %v41, %v48
  %v51 = vpack.i.b16 %v45, %v45
  %v53 = vlaneseq
  %v54 = vshrl.u32 %v53, 7
  %v55 = vsub.s32 0, %v54
  %v56 = vrot.slane %v51, %v55
  %v58 = vpack.i.b16 %v49, %v49
  %v60 = vlaneseq
  %v61 = vshrl.u32 %v60, 7
  %v62 = vsub.s32 0, %v61
  %v63 = vrot.slane %v58, %v62
  %v64 = vmul.bf16 %v56, %v28
  %v65 = vmul.bf16 %v63, %v29
  %v68 = vunpack.c.l.b16 %v28
  %v69 = vunpack.c.l.b16 %v29
  %v70 = vpack.c.b16 %v69, %v68
  %v73 = vunpack.c.l.b16 %v64
  %v74 = vunpack.c.l.b16 %v65
  %v75 = vpack.c.b16 %v74, %v73
  %76 = vrot.lane.b32.xlu0 %v75, 4
  %v77 = vpop.permute.xlu0 %76
  %v80 = vunpack.c.l.b16 %v56
  %v81 = vunpack.c.l.b16 %v63
  %v82 = vpack.c.b16 %v81, %v80
  %83 = vrot.lane.b32.xlu0 %v82, 8
  %v84 = vpop.permute.xlu0 %83
  %vm85 = vcmask 31744
  %v88 = vsel %vm85, %v70, %v77
  %vm89 = vcmask 64512
  %v91 = vsel %vm89, %v88, %v84
  %v92 = vld [vmem:[%s3] sm:$0xf]
  %v93 = vld [vmem:[%s3 + $0x4] sm:$0x3]
  %v94 = vlaneseq
  %v95 = vshrl.u32 %v94, 7
  %v96 = vsub.s32 0, %v95
  %v97 = vrot.slane %v31, %v96
  %v100 = vunpack.c.l.b16 %v92
  %v101 = vunpack.c.l.b16 %v93
  %v102 = vpack.c.b16 %v101, %v100
  %vm103 = vcmask 97280
  %v104 = vsel %vm103, %v91, 0
  %vm106 = vcmask 1045504
  %v108 = vsel %vm106, %v102, 0
  %110 = vmatprep.subr.bf16.mxu0 0
  %111 = vmatpush1.bf16.msra.mxu0 %v108
  %112 = vmatprep.subr.bf16.mxu0 0
  %113 = vmatpush1.bf16.msra.mxu0 0
  %114 = vmatprep.subr.bf16.mxu0 0
  %115 = vmatpush1.bf16.msra.mxu0 0
  %116 = vmatprep.subr.bf16.mxu0 0
  %117 = vmatpush1.bf16.msra.mxu0 0
  %118 = vmatprep.subr.bf16.mxu0 0
  %119 = vmatpush1.bf16.msra.mxu0 0
  %120 = vmatprep.subr.bf16.mxu0 0
  %121 = vmatpush1.bf16.msra.mxu0 0
  %122 = vmatprep.subr.bf16.mxu0 0
  %123 = vmatpush1.bf16.msra.mxu0 0
  %124 = vmatprep.subr.bf16.mxu0 0
  %125 = vmatpush1.bf16.msra.mxu0 0
  %126 = vmatprep.subr.bf16.mxu0 0
  %127 = vmatpush1.bf16.msra.mxu0 0
  %128 = vmatprep.subr.bf16.mxu0 0
  %129 = vmatpush1.bf16.msra.mxu0 0
  %130 = vmatprep.subr.bf16.mxu0 0
  %131 = vmatpush1.bf16.msra.mxu0 0
  %132 = vmatprep.subr.bf16.mxu0 0
  %133 = vmatpush1.bf16.msra.mxu0 0
  %134 = vmatprep.subr.bf16.mxu0 0
  %135 = vmatpush1.bf16.msra.mxu0 0
  %136 = vmatprep.subr.bf16.mxu0 0
  %137 = vmatpush1.bf16.msra.mxu0 0
  %138 = vmatprep.subr.bf16.mxu0 0
  %139 = vmatpush1.bf16.msra.mxu0 0
  %140 = vmatprep.subr.bf16.mxu0 0
  %141 = vmatpush1.bf16.msra.mxu0 0
  %142 = vmatprep.mubr.bf16.mxu0 0
  %143 = vmatmul.mubr.bf16.gmra.mrb[0].mxu0 %v104
  %v144 = vpop.f32.mrb[0].mxu0
  %v145 = vadd.f32 %v97, %v144
  %v146 = vpop.f32.mrb[0].mxu0
  %v147 = vpop.f32.mrb[0].mxu0
  %v148 = vadd.f32 %v97, %v147
  %v149 = vpop.f32.mrb[0].mxu0
  %150 = vdwg.mxu0
  %v151 = vxor.u32 %v145, 2147483648
  %v152 = vxor.u32 %v148, 2147483648
  %v153 = vmul.f32 %v151, 1.442695
  %v154 = vpow.pop %v153
  %v155 = vmul.f32 %v152, 1.442695
  %v156 = vpow.pop %v155
  %v157 = vadd.f32 %v154, 1.0
  %v158 = vadd.f32 %v156, 1.0
  %v159 = vrcp.pop %v157
  %v160 = vmul.f32 1.0, %v159
  %v161 = vrcp.pop %v158
  %v162 = vmul.f32 1.0, %v161
  %v163 = vsub.f32 1.0, %v160
  %v164 = vsub.f32 1.0, %v162
  %v165 = vlaneseq
  %v166 = vshrl.u32 %v165, 7
  %v167 = vsub.s32 0, %v166
  %v168 = vrot.slane %v32, %v167
  %v169 = vmul.f32 %v163, %v168
  %v170 = vmul.f32 %v164, %v168
  %v171 = vadd.f32 %v160, %v169
  %v172 = vadd.f32 %v162, %v170
  %v173 = vmul.f32 %v145, %v171
  %v174 = vmul.f32 %v148, %v172
  %v175 = vpack.c.bf16 %v174, %v173
  %v176 = vld [vmem:[%s5] sm:$0xf]
  %v177 = vld [vmem:[%s5 + $0x4] sm:$0xf]
  %v178 = vld [vmem:[%s5 + $0x8] sm:$0xf]
  %v179 = vld [vmem:[%s5 + $0xc] sm:$0xf]
  %v180 = vld [vmem:[%s5 + $0x10] sm:$0xf]
  %v181 = vld [vmem:[%s5 + $0x14] sm:$0xf]
  %v182 = vld [vmem:[%s5 + $0x18] sm:$0xf]
  %v183 = vld [vmem:[%s5 + $0x1c] sm:$0xf]
  %v184 = vlaneseq
  %v185 = vshrl.u32 %v184, 7
  %v186 = vsub.s32 0, %v185
  %v187 = vrot.slane %v33, %v186
  %v196 = vunpack.c.l.b16 %v176
  %v197 = vunpack.c.l.b16 %v177
  %v198 = vunpack.c.l.b16 %v178
  %v199 = vunpack.c.l.b16 %v179
  %v200 = vunpack.c.l.b16 %v180
  %v201 = vunpack.c.l.b16 %v181
  %v202 = vunpack.c.l.b16 %v182
  %v203 = vunpack.c.l.b16 %v183
  %v204 = vpack.c.b16 %v197, %v196
  %v205 = vpack.c.b16 %v199, %v198
  %v206 = vpack.c.b16 %v201, %v200
  %v207 = vpack.c.b16 %v203, %v202
  %vm212 = vcmask 523264
  %v214 = vsel %vm212, %v175, 0
  %216 = vmatprep.subr.bf16.mxu0 0
  %217 = vmatpush1.bf16.msra.mxu0 %v204
  %218 = vmatprep.subr.bf16.mxu0 0
  %219 = vmatpush1.bf16.msra.mxu0 %v205
  %220 = vmatprep.subr.bf16.mxu0 0
  %221 = vmatpush1.bf16.msra.mxu0 %v206
  %222 = vmatprep.subr.bf16.mxu0 0
  %223 = vmatpush1.bf16.msra.mxu0 %v207
  %224 = vmatprep.subr.bf16.mxu0 0
  %225 = vmatpush1.bf16.msra.mxu0 0
  %226 = vmatprep.subr.bf16.mxu0 0
  %227 = vmatpush1.bf16.msra.mxu0 0
  %228 = vmatprep.subr.bf16.mxu0 0
  %229 = vmatpush1.bf16.msra.mxu0 0
  %230 = vmatprep.subr.bf16.mxu0 0
  %231 = vmatpush1.bf16.msra.mxu0 0
  %232 = vmatprep.subr.bf16.mxu0 0
  %233 = vmatpush1.bf16.msra.mxu0 0
  %234 = vmatprep.subr.bf16.mxu0 0
  %235 = vmatpush1.bf16.msra.mxu0 0
  %236 = vmatprep.subr.bf16.mxu0 0
  %237 = vmatpush1.bf16.msra.mxu0 0
  %238 = vmatprep.subr.bf16.mxu0 0
  %239 = vmatpush1.bf16.msra.mxu0 0
  %240 = vmatprep.subr.bf16.mxu0 0
  %241 = vmatpush1.bf16.msra.mxu0 0
  %242 = vmatprep.subr.bf16.mxu0 0
  %243 = vmatpush1.bf16.msra.mxu0 0
  %244 = vmatprep.subr.bf16.mxu0 0
  %245 = vmatpush1.bf16.msra.mxu0 0
  %246 = vmatprep.subr.bf16.mxu0 0
  %247 = vmatpush1.bf16.msra.mxu0 0
  %248 = vmatprep.mubr.bf16.mxu0 0
  %249 = vmatmul.mubr.bf16.gmra.mrb[0].mxu0 %v214
  %v250 = vpop.f32.mrb[0].mxu0
  %v251 = vadd.f32 %v187, %v250
  %v252 = vpop.f32.mrb[0].mxu0
  %v253 = vpop.f32.mrb[0].mxu0
  %v254 = vadd.f32 %v187, %v253
  %v255 = vpop.f32.mrb[0].mxu0
  %256 = vdwg.mxu0
  %v257 = vxor.u32 %v251, 2147483648
  %v258 = vxor.u32 %v254, 2147483648
  %v259 = vmul.f32 %v257, 1.442695
  %v260 = vpow.pop %v259
  %v261 = vmul.f32 %v258, 1.442695
  %v262 = vpow.pop %v261
  %v263 = vadd.f32 %v260, 1.0
  %v264 = vadd.f32 %v262, 1.0
  %v265 = vrcp.pop %v263
  %v266 = vmul.f32 1.0, %v265
  %v267 = vrcp.pop %v264
  %v268 = vmul.f32 1.0, %v267
  %v269 = vsub.f32 1.0, %v266
  %v270 = vsub.f32 1.0, %v268
  %v271 = vlaneseq
  %v272 = vshrl.u32 %v271, 7
  %v273 = vsub.s32 0, %v272
  %v274 = vrot.slane %v34, %v273
  %v275 = vmul.f32 %v269, %v274
  %v276 = vmul.f32 %v270, %v274
  %v277 = vadd.f32 %v266, %v275
  %v278 = vadd.f32 %v268, %v276
  %v279 = vmul.f32 %v251, %v277
  %v280 = vmul.f32 %v254, %v278
  %v281 = vlaneseq
  %v282 = vshrl.u32 %v281, 7
  %v283 = vsub.s32 0, %v282
  %v284 = vrot.slane %v35, %v283
  %v285 = vmul.f32 %v279, %v284
  %v286 = vmul.f32 %v280, %v284
  %vm287 = vcmask 130048
  %v288 = vsel %vm287, %v285, 0.0
  %289 = vadd.xlane.f32.xlu0 %v288
  %v290 = vpop.xlane.xlu0 %289
  %v291 = vsel %vm287, %v286, 0.0
  %292 = vadd.xlane.f32.xlu0 %v291
  %v293 = vpop.xlane.xlu0 %292
  %s295 = vtos %v36
  %v296 = vstv %s295
  %v298 = vadd.f32 %v290, %v296
  %v299 = vadd.f32 %v293, %v296
  %vm300 = vcmp.gt.f32.partialorder %v30, 0.5
  %v303 = vlaneseq
  %v304 = vand.u32 %v303, 127
  %v305 = vlaneseq
  %v306 = vshrl.u32 %v305, 7
  %v307 = vsub.s32 %v304, %v306
  %v308 = vrot.slane %v298, %v307
  %v309 = vlaneseq
  %v310 = vshrl.u32 %v309, 7
  %v311 = vsub.s32 %v304, %v310
  %v312 = vrot.slane %v299, %v311
  %vm313 = vcmask 1041409
  %v314 = vsel %vm313, %v312, %v308
  %v316 = vsel %vm300, %v314, 0.0
  %v317 = vlaneseq
  %v318 = vshrl.u32 %v317, 7
  %v319 = vsub.s32 0, %v318
  %v320 = vrot.slane %v316, %v319
  %322 = vbcast.lane.b32.xlu0 %v320, 256
  %v323 = vpop.permute.xlu0 %322
  %v324 = vlaneseq
  %v325 = vshrl.u32 %v324, 7
  %v326 = vsub.s32 1, %v325
  %v327 = vrot.slane %v316, %v326
  %329 = vbcast.lane.b32.xlu0 %v327, 256
  %v330 = vpop.permute.xlu0 %329
  %v331 = vunpack.c.l.bf16 %v28
  %v332 = vunpack.c.l.bf16 %v29
  %v333 = vmul.f32 %v323, %v331
  %v334 = vmul.f32 %v330, %v332
  %v335 = vsel %vm85, %v333, 0.0
  %v336 = vrot.slane %v335, 4
  %v337 = vadd.f32 %v335, %v336
  %v338 = vrot.slane %v337, 2
  %v339 = vadd.f32 %v337, %v338
  %v340 = vrot.slane %v339, 1
  %v341 = vadd.f32 %v339, %v340
  %v342 = vsel %vm85, %v334, 0.0
  %v343 = vrot.slane %v342, 4
  %v344 = vadd.f32 %v342, %v343
  %v345 = vrot.slane %v344, 2
  %v346 = vadd.f32 %v344, %v345
  %v347 = vrot.slane %v346, 1
  %v348 = vadd.f32 %v346, %v347
  %v351 = vsel %vm313, %v348, %v341
  %353 = vxpose.xlu0.b32.start [1/16] %v351, 128
  %354 = vxpose.xlu0.b32.cont [2/16] 0.0, 128
  %355 = vxpose.xlu0.b32.cont [3/16] 0.0, 128
  %356 = vxpose.xlu0.b32.cont [4/16] 0.0, 128
  %357 = vxpose.xlu0.b32.cont [5/16] 0.0, 128
  %358 = vxpose.xlu0.b32.cont [6/16] 0.0, 128
  %359 = vxpose.xlu0.b32.cont [7/16] 0.0, 128
  %360 = vxpose.xlu0.b32.cont [8/16] 0.0, 128
  %361 = vxpose.xlu0.b32.cont [9/16] 0.0, 128
  %362 = vxpose.xlu0.b32.cont [10/16] 0.0, 128
  %363 = vxpose.xlu0.b32.cont [11/16] 0.0, 128
  %364 = vxpose.xlu0.b32.cont [12/16] 0.0, 128
  %365 = vxpose.xlu0.b32.cont [13/16] 0.0, 128
  %366 = vxpose.xlu0.b32.cont [14/16] 0.0, 128
  %367 = vxpose.xlu0.b32.cont [15/16] 0.0, 128
  %368 = vxpose.xlu0.b32.end [16/16] 0.0, 128
  %v369 = vpop.trf.xlu0
  %v370 = vpop.trf.xlu0
  %v371 = vpop.trf.xlu0
  %v372 = vpop.trf.xlu0
  %v373 = vpop.trf.xlu0
  %v374 = vpop.trf.xlu0
  %v375 = vpop.trf.xlu0
  %v376 = vpop.trf.xlu0
  %v377 = vpop.trf.xlu0
  %v378 = vpop.trf.xlu0
  %v379 = vpop.trf.xlu0
  %v380 = vpop.trf.xlu0
  %v381 = vpop.trf.xlu0
  %v382 = vpop.trf.xlu0
  %v383 = vpop.trf.xlu0
  %v384 = vpop.trf.xlu0
  %vm385 = vcmask 11264
  %386 = vst.msk [vmem:[%s7] sm:$0xf] %vm385, %v369
  // Predicated region
  $region30: #{tpu_custom_call.1} parent=0 // pred_check
    _
  $region31: #{tpu_custom_call.1} parent=0 // pred_check_branch
    %388 = sbr.rel (0) target = $region33
  $region32: #{tpu_custom_call.1} parent=0 // pred_region
    _
  $region33: #{tpu_custom_call.1} parent=0 // pred_fallthru
    _
  // Predicated region
  $region34: #{tpu_custom_call.1} parent=0 // pred_check
    _
  $region35: #{tpu_custom_call.1} parent=0 // pred_check_branch
    %390 = sbr.rel (0) target = $region37
  $region36: #{tpu_custom_call.1} parent=0 // pred_region
    _
  $region37: #{tpu_custom_call.1} parent=0 // pred_fallthru
    _

</llo_original>
